<compile_context>
chip_gen: v7x
topology: tpu7x:2x2x1
jax: 0.10.0
libtpu: 0.0.40
codegen_flags: <defaults>
</compile_context>

<pallas_src>
import jax
import jax.numpy as jnp
from jax.experimental import pallas as pl
from jax.experimental.pallas import tpu as pltpu

# ---------------- config (small, consistent with the module) ----------------
B = 2           # batch
C_IN = 4        # in_channels
IMG = 16        # spatial size (H = W)
PATCH = 4       # patch_size
EMB = 128       # embedding_dim (multiple of 128 -> lane-dense output)

HP = IMG // PATCH
N_PATCHES = HP * HP
K_DIM = C_IN * PATCH * PATCH


# ------------------------------ Pallas kernel --------------------------------
def _patch_embed_kernel(p_ref, w_ref, b_ref, o_ref):
    # Fused conv-as-matmul + bias.  Everything lives in VMEM; M = B*Np,
    # N = D (lane-dense 128), K = C*P*P.  f32 accumulation on the MXU.
    o_ref[...] = (
        jnp.dot(p_ref[...], w_ref[...], preferred_element_type=jnp.float32)
        + b_ref[...]
    )


# ------------------------------ module factory --------------------------------
def make_patch_embedding(conv_w, conv_b):
    """Build the PatchEmbedding forward.

    conv_w: (D, C, P, P)  Conv2d weight (PyTorch OIHW layout).
    conv_b: (D,)          Conv2d bias.

    Weight flatten/transpose happens ONCE here (init time).  The returned
    jitted `forward(x)` takes NCHW x of shape (B, C, H, W) and returns
    (B, num_patches, D) == Conv2d(k=s=P) -> Flatten(-2,-1) -> permute(0,2,1).
    """
    D, C, P, P2 = conv_w.shape
    assert P == P2
    K = C * P * P

    # Precomputed once: (K, D) RHS in (c, kh, kw) flatten order matching the
    # patch extraction below; bias broadcast row.
    w_flat = jnp.asarray(conv_w, jnp.float32).reshape(D, K).T    # (K, D)
    b_flat = jnp.asarray(conv_b, jnp.float32).reshape(1, D)      # (1, D)

    @jax.jit
    def forward(x):
        Bx, Cx, H, W = x.shape
        assert Cx == C, f"channel mismatch: {Cx} vs weight {C}"
        assert H % P == 0 and W % P == 0, (
            f"Input image shape {(H, W)} must be divisible by patch_size {P}")
        hp, wp = H // P, W // P
        n_patches = hp * wp
        M = Bx * n_patches

        # Layout plumbing only (no FLOPs), fused into the same XLA program as
        # the pallas_call: extract non-overlapping PxP patches, flattened in
        # (c, kh, kw) order -- identical to the Conv2d weight order.
        patches = x.reshape(Bx, C, hp, P, wp, P)
        patches = patches.transpose(0, 2, 4, 1, 3, 5)            # (B,hp,wp,C,P,P)
        patches = patches.reshape(M, K).astype(jnp.float32)

        out = pl.pallas_call(
            _patch_embed_kernel,
            out_shape=jax.ShapeDtypeStruct((M, D), jnp.float32),
            in_specs=[pl.BlockSpec(memory_space=pltpu.MemorySpace.VMEM)] * 3,
            out_specs=pl.BlockSpec(memory_space=pltpu.MemorySpace.VMEM),
            cost_estimate=pl.CostEstimate(
                flops=2 * M * K * D,
                bytes_accessed=(M * K + K * D + M * D) * 4,
                transcendentals=0),
        )(patches, w_flat, b_flat)

        # Leading-dim reshape only (metadata) -> (B, Np, D), matching the module.
        return out.reshape(Bx, n_patches, D)

    return forward


# --------------------------- pure-JAX reference -------------------------------
def patch_embedding_reference(x, conv_w, conv_b):
    P = conv_w.shape[-1]
    y = jax.lax.conv_general_dilated(
        x, conv_w, window_strides=(P, P), padding="VALID",
        dimension_numbers=("NCHW", "OIHW", "NCHW"),
        precision=jax.lax.Precision.HIGHEST)                     # (B, D, hp, wp)
    Bx, D, hp, wp = y.shape
    y = y + conv_b.reshape(1, D, 1, 1)
    y = y.reshape(Bx, D, hp * wp)                                # flatten(-2,-1)
    return jnp.transpose(y, (0, 2, 1))                           # permute(0,2,1)


# ------------------------------------ main ------------------------------------
if __name__ == "__main__":
    key = jax.random.PRNGKey(0)
    kx, kw, kb = jax.random.split(key, 3)
    x = jax.random.normal(kx, (B, C_IN, IMG, IMG), dtype=jnp.float32)
    conv_w = (0.02 * jax.random.normal(kw, (EMB, C_IN, PATCH, PATCH))
              ).astype(jnp.float32)
    conv_b = (0.02 * jax.random.normal(kb, (EMB,))).astype(jnp.float32)

    forward = make_patch_embedding(conv_w, conv_b)   # weight layout fixed at init

    out = jax.block_until_ready(forward(x))
    assert out.shape == (B, N_PATCHES, EMB), out.shape

    ref = jax.block_until_ready(patch_embedding_reference(x, conv_w, conv_b))
    max_err = float(jnp.max(jnp.abs(out - ref)))
    assert jnp.allclose(out, ref, atol=1e-3, rtol=1e-3), max_err

    print("KERNEL_OK")
</pallas_src>

<mosaic_0001>
module attributes {stable_mosaic.version = 11 : i64} {
  func.func @_patch_embed_kernel(%arg0: memref<32x64xf32, #tpu.memory_space<vmem>>, %arg1: memref<64x128xf32, #tpu.memory_space<vmem>>, %arg2: memref<1x128xf32, #tpu.memory_space<vmem>>, %arg3: memref<32x128xf32, #tpu.memory_space<vmem>>) attributes {dimension_semantics = [], scalar_prefetch = 0 : i64, scratch_operands = 0 : i64, tpu.core_type = #tpu.core_type<tc>} {
    %c0 = arith.constant 0 : index
    %c0_0 = arith.constant 0 : index
    %0 = vector.load %arg0[%c0, %c0_0] : memref<32x64xf32, #tpu.memory_space<vmem>>, vector<32x64xf32>
    %c0_1 = arith.constant 0 : index
    %c0_2 = arith.constant 0 : index
    %1 = vector.load %arg1[%c0_1, %c0_2] : memref<64x128xf32, #tpu.memory_space<vmem>>, vector<64x128xf32>
    %cst = arith.constant dense<0.000000e+00> : vector<32x128xf32>
    %2 = tpu.matmul %0, %1, %cst {dimension_numbers = #tpu.dot_dimension_numbers<[1], [0], [0], [1], [0, 0, 1, 1], [], []>} : vector<32x64xf32>, vector<64x128xf32>, vector<32x128xf32> -> vector<32x128xf32>
    %c0_3 = arith.constant 0 : index
    %c0_4 = arith.constant 0 : index
    %3 = vector.load %arg2[%c0_3, %c0_4] : memref<1x128xf32, #tpu.memory_space<vmem>>, vector<1x128xf32>
    %4 = vector.broadcast %3 : vector<1x128xf32> to vector<32x128xf32>
    %5 = arith.addf %2, %4 : vector<32x128xf32>
    %c0_5 = arith.constant 0 : index
    %c0_6 = arith.constant 0 : index
    %6 = vector.load %arg3[%c0_5, %c0_6] : memref<32x128xf32, #tpu.memory_space<vmem>>, vector<32x128xf32>
    tpu.vector_store %arg3[%c0_5, %c0_6], %5 {strides = array<i32>} : memref<32x128xf32, #tpu.memory_space<vmem>>, vector<32x128xf32>,
    return
  }
}

</mosaic_0001>

<llo_original>
// kernel: forward.1
$region0: #{forward.1}
  #allocation0 [shape = 'u32[]', space=smem, size = 0x4, offset = 0x4, fixed_abs, tag = 'smem constant byte address 0x4 - core index']
  #allocation1 [shape = 'u32[144,128]{1,0:T(1,128)}', space=vmem, size = 0x12000, scoped, tag = 'internal scratch']
  %s0 = inlined_call_operand.vmem [shape: f32[32,64], index: 0, kind: input, shape index: {}]
  %s1 = inlined_call_operand.vmem [shape: f32[64,128], index: 1, kind: input, shape index: {}]
  %s2 = inlined_call_operand.vmem [shape: f32[1,128], index: 2, kind: input, shape index: {}]
  %s3 = inlined_call_operand.hbm [shape: f32[32,128], index: 3, kind: output, shape index: {}]
  %s4 = sld [smem:[#allocation0]]
  $region22: #{forward.1} parent=0
    _
  %s6 = ssub.s32 1, %s4
  %s7 = scalar_select 0, %s6, %s4
  $region1: #{forward.1} parent=0
    #allocation2 [shape = 'u8[16384]{0}', space=vmem, size = 0x4000, scoped, tag = 'output window, operand 0, single buffered']
    #allocation3 [shape = 's32[1]{0}', space=sflag, size = 0x4, scoped, tag = 'scoped memory for forward.1']
    %8 = vsyncpa [#allocation3], 0
    // Predicated region
    $region2: #{forward.1} parent=1 // pred_check
      _
    $region3: #{forward.1} parent=1 // pred_check_branch
      %10 = sbr.rel (0) target = $region5
    $region4: #{forward.1} parent=1 // pred_region
      _
    $region5: #{forward.1} parent=1 // pred_fallthru
      _
    // Predicated region
    $region6: #{forward.1} parent=1 // pred_check
      _
    $region7: #{forward.1} parent=1 // pred_check_branch
      %12 = sbr.rel (0) target = $region9
    $region8: #{forward.1} parent=1 // pred_region
      _
    $region9: #{forward.1} parent=1 // pred_fallthru
      _
    // Predicated region
    $region10: #{forward.1} parent=1 // pred_check
      _
    $region11: #{forward.1} parent=1 // pred_check_branch
      %14 = sbr.rel (0) target = $region13
    $region12: #{forward.1} parent=1 // pred_region
      _
    $region13: #{forward.1} parent=1 // pred_fallthru
      _
    %v15 = vld [vmem:[%s0] sm:$0xff]
    %v16 = vld [vmem:[%s0 + $0x8] sm:$0xff]
    %v17 = vld [vmem:[%s0 + $0x10] sm:$0xff]
    %v18 = vld [vmem:[%s0 + $0x18] sm:$0xff]
    %v19 = vld [vmem:[%s1] sm:$0xff]
    %v20 = vld [vmem:[%s1 + $0x8] sm:$0xff]
    %v21 = vld [vmem:[%s1 + $0x10] sm:$0xff]
    %v22 = vld [vmem:[%s1 + $0x18] sm:$0xff]
    %v23 = vld [vmem:[%s1 + $0x20] sm:$0xff]
    %v24 = vld [vmem:[%s1 + $0x28] sm:$0xff]
    %v25 = vld [vmem:[%s1 + $0x30] sm:$0xff]
    %v26 = vld [vmem:[%s1 + $0x38] sm:$0xff]
    %v27 = vld [vmem:[%s2] sm:$0x1]
    %v29 = vlaneseq
    %v30 = vshrl.u32 %v29, 7
    %v31 = vsub.s32 0, %v30
    %v32 = vrot.slane %v27, %v31
    %vm34 = vcmask 523264
    %v36 = vsel %vm34, %v15, 0
    %v39 = vsel %vm34, %v16, 0
    %v42 = vsel %vm34, %v17, 0
    %v45 = vsel %vm34, %v18, 0
    %47 = vmatprep.subr.mxu0 0.0
    %48 = vmatpush1.msra.mxu0 %v19
    %49 = vmatprep.subr.mxu0 0.0
    %50 = vmatpush1.msra.mxu0 %v20
    %51 = vmatprep.subr.mxu0 0.0
    %52 = vmatpush1.msra.mxu0 %v21
    %53 = vmatprep.subr.mxu0 0.0
    %54 = vmatpush1.msra.mxu0 %v22
    %55 = vmatprep.subr.mxu0 0.0
    %56 = vmatpush1.msra.mxu0 %v23
    %57 = vmatprep.subr.mxu0 0.0
    %58 = vmatpush1.msra.mxu0 %v24
    %59 = vmatprep.subr.mxu0 0.0
    %60 = vmatpush1.msra.mxu0 %v25
    %61 = vmatprep.subr.mxu0 0.0
    %62 = vmatpush1.msra.mxu0 %v26
    %63 = vmatprep.subr.mxu0 0.0
    %64 = vmatpush1.msra.mxu0 0.0
    %65 = vmatprep.subr.mxu0 0.0
    %66 = vmatpush1.msra.mxu0 0.0
    %67 = vmatprep.subr.mxu0 0.0
    %68 = vmatpush1.msra.mxu0 0.0
    %69 = vmatprep.subr.mxu0 0.0
    %70 = vmatpush1.msra.mxu0 0.0
    %71 = vmatprep.subr.mxu0 0.0
    %72 = vmatpush1.msra.mxu0 0.0
    %73 = vmatprep.subr.mxu0 0.0
    %74 = vmatpush1.msra.mxu0 0.0
    %75 = vmatprep.subr.mxu0 0.0
    %76 = vmatpush1.msra.mxu0 0.0
    %77 = vmatprep.subr.mxu0 0.0
    %78 = vmatpush1.msra.mxu0 0.0
    %79 = vmatprep.subr.mxu0 0.0
    %80 = vmatpush1.msra.mxu0 0.0
    %81 = vmatprep.subr.mxu0 0.0
    %82 = vmatpush1.msra.mxu0 0.0
    %83 = vmatprep.subr.mxu0 0.0
    %84 = vmatpush1.msra.mxu0 0.0
    %85 = vmatprep.subr.mxu0 0.0
    %86 = vmatpush1.msra.mxu0 0.0
    %87 = vmatprep.subr.mxu0 0.0
    %88 = vmatpush1.msra.mxu0 0.0
    %89 = vmatprep.subr.mxu0 0.0
    %90 = vmatpush1.msra.mxu0 0.0
    %91 = vmatprep.subr.mxu0 0.0
    %92 = vmatpush1.msra.mxu0 0.0
    %93 = vmatprep.subr.mxu0 0.0
    %94 = vmatpush1.msra.mxu0 0.0
    %95 = vmatprep.subr.mxu0 0.0
    %96 = vmatpush1.msra.mxu0 0.0
    %97 = vmatprep.subr.mxu0 0.0
    %98 = vmatpush1.msra.mxu0 0.0
    %99 = vmatprep.subr.mxu0 0.0
    %100 = vmatpush1.msra.mxu0 0.0
    %101 = vmatprep.subr.mxu0 0.0
    %102 = vmatpush1.msra.mxu0 0.0
    %103 = vmatprep.subr.mxu0 0.0
    %104 = vmatpush1.msra.mxu0 0.0
    %105 = vmatprep.subr.mxu0 0.0
    %106 = vmatpush1.msra.mxu0 0.0
    %107 = vmatprep.subr.mxu0 0.0
    %108 = vmatpush1.msra.mxu0 0.0
    %109 = vmatprep.subr.mxu0 0.0
    %110 = vmatpush1.msra.mxu0 0.0
    %111 = vmatprep.mubr.f32.mxu0 0.0
    %112 = vmatmul.mubr.f32.gmra.mrb[0].mxu0 %v36
    %v113 = vpop.f32.mrb[0].mxu0
    %v114 = vadd.f32 %v32, %v113
    %v115 = vpop.f32.mrb[0].mxu0
    %116 = vmatprep.mubr.f32.mxu0 0.0
    %117 = vmatmul.mubr.f32.gmra.mrb[0].mxu0 %v39
    %v118 = vpop.f32.mrb[0].mxu0
    %v119 = vadd.f32 %v32, %v118
    %v120 = vpop.f32.mrb[0].mxu0
    %121 = vmatprep.mubr.f32.mxu0 0.0
    %122 = vmatmul.mubr.f32.gmra.mrb[0].mxu0 %v42
    %v123 = vpop.f32.mrb[0].mxu0
    %v124 = vadd.f32 %v32, %v123
    %v125 = vpop.f32.mrb[0].mxu0
    %126 = vmatprep.mubr.f32.mxu0 0.0
    %127 = vmatmul.mubr.f32.gmra.mrb[0].mxu0 %v45
    %v128 = vpop.f32.mrb[0].mxu0
    %v129 = vadd.f32 %v32, %v128
    %v130 = vpop.f32.mrb[0].mxu0
    %131 = vdwg.mxu0
    %132 = vst [vmem:[#allocation2] sm:$0xff] %v114
    %133 = vst [vmem:[#allocation2 + $0x8] sm:$0xff] %v119
    %134 = vst [vmem:[#allocation2 + $0x10] sm:$0xff] %v124
    %135 = vst [vmem:[#allocation2 + $0x18] sm:$0xff] %v129
    // Predicated region
    $region14: #{forward.1} parent=1 // pred_check
      _
    $region15: #{forward.1} parent=1 // pred_check_branch
      %137 = sbr.rel (0) target = $region17
    $region16: #{forward.1} parent=1 // pred_region
      %s139 = ssub.s32 512, 512
      %140 = vsyncadd [#allocation3], %s139
      %s141 = sshll.u32 [#allocation2], 4
      %s142 = int_to_ptr.vmem [resolvable:$true] %s141
      %147 = dma.vmem_to_hbm [thread:$0]  %s142, 512, %s3, [#allocation3], 128, 128, 8
    $region17: #{forward.1} parent=1 // pred_fallthru
      _
    // Predicated region
    $region18: #{forward.1} parent=1 // pred_check
      _
    $region19: #{forward.1} parent=1 // pred_check_branch
      %149 = sbr.rel (0) target = $region21
    $region20: #{forward.1} parent=1 // pred_region
      %150 = dma.done [#allocation3], 512
    $region21: #{forward.1} parent=1 // pred_fallthru
      _
    %151 = vsyncpa [#allocation3], 1

</llo_original>
